<compile_context>
chip_gen: v6e
topology: v6e:2x2x1
jax: 0.10.0
libtpu: 0.0.40
codegen_flags: <defaults>
</compile_context>

<pallas_src>
import functools

import numpy as np
import jax
import jax.numpy as jnp
from jax import lax
from jax.experimental import pallas as pl
from jax.experimental.pallas import tpu as pltpu

LN_EPS = 1e-5


# ------------------------------------------------------------------ helpers ---

def _row_tiles(M, cap=256):
    """Pick a row tile (multiple of 8, capped) and the padded row count."""
    tm = min(((M + 7) // 8) * 8, cap)
    Mp = ((M + tm - 1) // tm) * tm
    return tm, Mp


def _pad_rows(x, Mp):
    M = x.shape[0]
    if Mp == M:
        return x
    return jnp.pad(x, ((0, Mp - M), (0, 0)))


def _layernorm(z, g, b, eps):
    mu = jnp.mean(z, axis=-1, keepdims=True)
    var = jnp.mean((z - mu) ** 2, axis=-1, keepdims=True)
    return (z - mu) * lax.rsqrt(var + eps) * g + b


# --------------------------------------------------- fused MHA + add + LN ----

def _mha_addln_kernel(*refs, nheads, fuse_qkv, eps):
    if fuse_qkv:
        xq_ref, wqkv_ref, bqkv_ref, wo_ref, bo_ref, g_ref, bln_ref, o_ref = refs
    else:
        xq_ref, xkv_ref, wqkv_ref, bqkv_ref, wo_ref, bo_ref, g_ref, bln_ref, o_ref = refs

    xq = xq_ref[0]                                   # (Sq, E) f32
    E = xq.shape[-1]
    Dh = E // nheads
    scale = 1.0 / float(np.sqrt(Dh))
    wqkv = wqkv_ref[...]                             # (E, 3E) bf16
    bqkv = bqkv_ref[...]                             # (1, 3E) f32

    if fuse_qkv:
        qkv = jnp.dot(xq.astype(jnp.bfloat16), wqkv,
                      preferred_element_type=jnp.float32) + bqkv
        q = qkv[:, :E]
        k = qkv[:, E:2 * E]
        v = qkv[:, 2 * E:]
    else:
        xkv = xkv_ref[0]                             # (Sk, E)
        q = jnp.dot(xq.astype(jnp.bfloat16), wqkv[:, :E],
                    preferred_element_type=jnp.float32) + bqkv[:, :E]
        kv = jnp.dot(xkv.astype(jnp.bfloat16), wqkv[:, E:],
                     preferred_element_type=jnp.float32) + bqkv[:, E:]
        k = kv[:, :E]
        v = kv[:, E:]

    wo = wo_ref[...]                                 # (E, E) bf16
    # Per-head attention, accumulated straight into the output projection:
    #   concat_h(o_h) @ Wo  ==  sum_h o_h @ Wo[h*Dh:(h+1)*Dh, :]
    acc = jnp.zeros((q.shape[0], E), jnp.float32)
    for h in range(nheads):
        qh = q[:, h * Dh:(h + 1) * Dh]
        kh = k[:, h * Dh:(h + 1) * Dh]
        vh = v[:, h * Dh:(h + 1) * Dh]
        s = lax.dot_general(qh.astype(jnp.bfloat16), kh.astype(jnp.bfloat16),
                            (((1,), (1,)), ((), ())),
                            preferred_element_type=jnp.float32) * scale   # (Sq, Sk)
        m = jnp.max(s, axis=-1, keepdims=True)
        p = jnp.exp(s - m)
        p = p * pl.reciprocal(jnp.sum(p, axis=-1, keepdims=True), approx=True)
        oh = jnp.dot(p.astype(jnp.bfloat16), vh.astype(jnp.bfloat16),
                     preferred_element_type=jnp.float32)                  # (Sq, Dh)
        acc = acc + jnp.dot(oh.astype(jnp.bfloat16), wo[h * Dh:(h + 1) * Dh, :],
                            preferred_element_type=jnp.float32)

    z = xq + acc + bo_ref[...]
    o_ref[0] = _layernorm(z, g_ref[...], bln_ref[...], eps)


def pallas_mha_addln(x_q, x_kv, attn_p, ln_p, nheads, fuse_qkv):
    """LayerNorm(x_q + MHA(x_q, x_kv)) -- one pallas_call, grid over batch."""
    B, Sq, E = x_q.shape
    in_arrays = [x_q]
    in_specs = [pl.BlockSpec((1, Sq, E), lambda b: (b, 0, 0))]
    if not fuse_qkv:
        Sk = x_kv.shape[1]
        in_arrays.append(x_kv)
        in_specs.append(pl.BlockSpec((1, Sk, E), lambda b: (b, 0, 0)))
    in_arrays += [attn_p["wqkv"], attn_p["bqkv"], attn_p["wo"], attn_p["bo"],
                  ln_p["g"], ln_p["b"]]
    in_specs += [
        pl.BlockSpec((E, 3 * E), lambda b: (0, 0)),
        pl.BlockSpec((1, 3 * E), lambda b: (0, 0)),
        pl.BlockSpec((E, E), lambda b: (0, 0)),
        pl.BlockSpec((1, E), lambda b: (0, 0)),
        pl.BlockSpec((1, E), lambda b: (0, 0)),
        pl.BlockSpec((1, E), lambda b: (0, 0)),
    ]
    return pl.pallas_call(
        functools.partial(_mha_addln_kernel, nheads=nheads, fuse_qkv=fuse_qkv, eps=LN_EPS),
        out_shape=jax.ShapeDtypeStruct((B, Sq, E), jnp.float32),
        grid=(B,),
        in_specs=in_specs,
        out_specs=pl.BlockSpec((1, Sq, E), lambda b: (b, 0, 0)),
        compiler_params=pltpu.CompilerParams(dimension_semantics=("parallel",)),
    )(*in_arrays)


# --------------------------------------------------- fused FFN + add + LN ----

def _ffn_addln_kernel(x_ref, w1_ref, b1_ref, w2_ref, b2_ref, g_ref, bln_ref, o_ref, *, eps):
    x = x_ref[...]                                                   # (tm, E) f32
    h = jnp.dot(x.astype(jnp.bfloat16), w1_ref[...],
                preferred_element_type=jnp.float32) + b1_ref[...]    # (tm, F) stays in VMEM
    h = jnp.maximum(h, 0.0)
    y = jnp.dot(h.astype(jnp.bfloat16), w2_ref[...],
                preferred_element_type=jnp.float32) + b2_ref[...]
    z = x + y
    o_ref[...] = _layernorm(z, g_ref[...], bln_ref[...], eps)


def pallas_ffn_addln(x2d, ffn_p, ln_p):
    """LayerNorm(x + lin2(relu(lin1(x)))) with M-tiled grid."""
    M, E = x2d.shape
    F = ffn_p["w1"].shape[1]
    tm, Mp = _row_tiles(M)
    xp = _pad_rows(x2d, Mp)
    out = pl.pallas_call(
        functools.partial(_ffn_addln_kernel, eps=LN_EPS),
        out_shape=jax.ShapeDtypeStruct((Mp, E), jnp.float32),
        grid=(Mp // tm,),
        in_specs=[
            pl.BlockSpec((tm, E), lambda i: (i, 0)),
            pl.BlockSpec((E, F), lambda i: (0, 0)),
            pl.BlockSpec((1, F), lambda i: (0, 0)),
            pl.BlockSpec((F, E), lambda i: (0, 0)),
            pl.BlockSpec((1, E), lambda i: (0, 0)),
            pl.BlockSpec((1, E), lambda i: (0, 0)),
            pl.BlockSpec((1, E), lambda i: (0, 0)),
        ],
        out_specs=pl.BlockSpec((tm, E), lambda i: (i, 0)),
        compiler_params=pltpu.CompilerParams(dimension_semantics=("parallel",)),
    )(xp, ffn_p["w1"], ffn_p["b1"], ffn_p["w2"], ffn_p["b2"], ln_p["g"], ln_p["b"])
    return out[:M]


# ----------------------------------- fused STFT-forward + wav_linear_in ------

def _stft_embed_kernel(fr_ref, fb_ref, wi_ref, bi_ref, ft_ref, emb_ref, *, cutoff):
    fr = fr_ref[...]                                                 # (tm, nfft_pad) f32
    ft = jnp.dot(fr, fb_ref[...], preferred_element_type=jnp.float32)  # (tm, 2c)
    ft_ref[...] = ft
    real = ft[:, :cutoff]
    imag = ft[:, cutoff:]
    mag = jnp.sqrt(real * real + imag * imag)
    y = jnp.dot(mag.astype(jnp.bfloat16), wi_ref[...],
                preferred_element_type=jnp.float32) + bi_ref[...]
    emb_ref[...] = jnp.where(y > 0, y, 0.01 * y)                     # LeakyReLU(0.01)


def pallas_stft_embed(frames2d, fb_pad, wav_in_p, cutoff):
    M, Kp = frames2d.shape
    E = wav_in_p["w"].shape[1]
    tm, Mp = _row_tiles(M)
    fr = _pad_rows(frames2d, Mp)
    ft, emb = pl.pallas_call(
        functools.partial(_stft_embed_kernel, cutoff=cutoff),
        out_shape=(jax.ShapeDtypeStruct((Mp, 2 * cutoff), jnp.float32),
                   jax.ShapeDtypeStruct((Mp, E), jnp.float32)),
        grid=(Mp // tm,),
        in_specs=[
            pl.BlockSpec((tm, Kp), lambda i: (i, 0)),
            pl.BlockSpec((Kp, 2 * cutoff), lambda i: (0, 0)),
            pl.BlockSpec((cutoff, E), lambda i: (0, 0)),
            pl.BlockSpec((1, E), lambda i: (0, 0)),
        ],
        out_specs=(pl.BlockSpec((tm, 2 * cutoff), lambda i: (i, 0)),
                   pl.BlockSpec((tm, E), lambda i: (i, 0))),
        compiler_params=pltpu.CompilerParams(dimension_semantics=("parallel",)),
    )(fr, fb_pad, wav_in_p["w"], wav_in_p["b"])
    return ft[:M], emb[:M]


# ---------------------------- fused mean + msg_linear_in + broadcast adds ----

def _msg_fuse_kernel(enc_ref, px_ref, w_ref, wm_ref, bm_ref, o_ref):
    enc = enc_ref[0]                                                 # (S, E)
    wav_feat = jnp.mean(enc, axis=0, keepdims=True)                  # (1, E)
    y = jnp.dot(w_ref[0].astype(jnp.bfloat16), wm_ref[...],
                preferred_element_type=jnp.float32) + bm_ref[...]
    msg_feat = jnp.where(y > 0, y, 0.01 * y)                         # (1, E)
    o_ref[0] = px_ref[0] + wav_feat + msg_feat                       # broadcast over S


def pallas_msg_fuse(enc, p_x, w_msg, msg_in_p):
    B, S, E = enc.shape
    L = w_msg.shape[2]
    return pl.pallas_call(
        _msg_fuse_kernel,
        out_shape=jax.ShapeDtypeStruct((B, S, E), jnp.float32),
        grid=(B,),
        in_specs=[
            pl.BlockSpec((1, S, E), lambda b: (b, 0, 0)),
            pl.BlockSpec((1, S, E), lambda b: (b, 0, 0)),
            pl.BlockSpec((1, 1, L), lambda b: (b, 0, 0)),
            pl.BlockSpec((L, E), lambda b: (0, 0)),
            pl.BlockSpec((1, E), lambda b: (0, 0)),
        ],
        out_specs=pl.BlockSpec((1, S, E), lambda b: (b, 0, 0)),
        compiler_params=pltpu.CompilerParams(dimension_semantics=("parallel",)),
    )(enc, p_x, w_msg, msg_in_p["w"], msg_in_p["b"])


# ----------------------- fused wav_linear_out + recombine + inverse basis ----

def _wavout_istft_kernel(x_ref, w_ref, b_ref, cos_ref, sin_ref, ib_ref, o_ref):
    spec = jnp.dot(x_ref[...].astype(jnp.bfloat16), w_ref[...],
                   preferred_element_type=jnp.float32) + b_ref[...]          # (tm, c)
    rec = jnp.concatenate([spec * cos_ref[...], spec * sin_ref[...]], axis=-1)  # (tm, 2c)
    o_ref[...] = jnp.dot(rec, ib_ref[...], preferred_element_type=jnp.float32)  # (tm, n_fft)


def pallas_wavout_istft(dec2d, wav_out_p, cosph, sinph, inv_basis):
    M, E = dec2d.shape
    cutoff = wav_out_p["w"].shape[1]
    n_fft = inv_basis.shape[1]
    tm, Mp = _row_tiles(M)
    xp = _pad_rows(dec2d, Mp)
    cp = _pad_rows(cosph, Mp)
    sp = _pad_rows(sinph, Mp)
    out = pl.pallas_call(
        _wavout_istft_kernel,
        out_shape=jax.ShapeDtypeStruct((Mp, n_fft), jnp.float32),
        grid=(Mp // tm,),
        in_specs=[
            pl.BlockSpec((tm, E), lambda i: (i, 0)),
            pl.BlockSpec((E, cutoff), lambda i: (0, 0)),
            pl.BlockSpec((1, cutoff), lambda i: (0, 0)),
            pl.BlockSpec((tm, cutoff), lambda i: (i, 0)),
            pl.BlockSpec((tm, cutoff), lambda i: (i, 0)),
            pl.BlockSpec((2 * cutoff, n_fft), lambda i: (0, 0)),
        ],
        out_specs=pl.BlockSpec((tm, n_fft), lambda i: (i, 0)),
        compiler_params=pltpu.CompilerParams(dimension_semantics=("parallel",)),
    )(xp, wav_out_p["w"], wav_out_p["b"], cp, sp, inv_basis)
    return out[:M]


# ------------------------------------------------------------ parameters -----

def _rand(key, shape, scale=0.08):
    return jax.random.normal(key, shape, jnp.float32) * scale


def init_attn_params(key, e):
    k1, k2, k3, k4 = jax.random.split(key, 4)
    return {"wqkv": _rand(k1, (e, 3 * e)).astype(jnp.bfloat16),
            "bqkv": _rand(k2, (1, 3 * e)),
            "wo": _rand(k3, (e, e)).astype(jnp.bfloat16),
            "bo": _rand(k4, (1, e))}


def init_ffn_params(key, e, dff):
    k1, k2, k3, k4 = jax.random.split(key, 4)
    return {"w1": _rand(k1, (e, dff)).astype(jnp.bfloat16),
            "b1": _rand(k2, (1, dff)),
            "w2": _rand(k3, (dff, e)).astype(jnp.bfloat16),
            "b2": _rand(k4, (1, e))}


def init_ln_params(e):
    return {"g": jnp.ones((1, e), jnp.float32), "b": jnp.zeros((1, e), jnp.float32)}


def init_fc_params(key, din, dout):
    k1, k2 = jax.random.split(key)
    return {"w": _rand(k1, (din, dout)).astype(jnp.bfloat16), "b": _rand(k2, (1, dout))}


def init_encoder_layer_params(key, e, dff):
    k1, k2 = jax.random.split(key)
    return {"attn": init_attn_params(k1, e), "ffn": init_ffn_params(k2, e, dff),
            "ln1": init_ln_params(e), "ln2": init_ln_params(e)}


def init_decoder_layer_params(key, e, dff):
    k1, k2, k3 = jax.random.split(key, 3)
    return {"self_attn": init_attn_params(k1, e), "cross_attn": init_attn_params(k2, e),
            "ffn": init_ffn_params(k3, e, dff),
            "ln1": init_ln_params(e), "ln2": init_ln_params(e), "ln3": init_ln_params(e)}


def init_encoder_params(key, n_fft, msg_length, nlayers, dff):
    win_dim = n_fft // 2 + 1
    e = win_dim                                    # embedding_dim = win_dim (as in __init__)
    keys = jax.random.split(key, 3 + 2 * nlayers)
    return {
        "wav_in": init_fc_params(keys[0], win_dim, e),
        "wav_out": init_fc_params(keys[1], e, win_dim),
        "msg_in": init_fc_params(keys[2], msg_length, e),
        "enc_layers": [init_encoder_layer_params(keys[3 + i], e, dff) for i in range(nlayers)],
        "dec_layers": [init_decoder_layer_params(keys[3 + nlayers + i], e, dff)
                       for i in range(nlayers)],
    }


# ------------------------------------------------------------------ STFT -----
# Mirrors torch-stft (conv1d with windowed real-DFT basis / conv_transpose1d with
# pinv basis + window-sum-square correction).

def make_stft_consts(n_fft, hop):
    cutoff = n_fft // 2 + 1
    fourier = np.fft.fft(np.eye(n_fft))
    basis = np.vstack([np.real(fourier[:cutoff]), np.imag(fourier[:cutoff])])   # (2c, n_fft)
    n = np.arange(n_fft)
    window = 0.5 - 0.5 * np.cos(2.0 * np.pi * n / n_fft)                        # hann, fftbins
    forward_basis = (basis * window[None, :]).astype(np.float32)                # (2c, n_fft)
    scale = n_fft / float(hop)
    inverse_basis = (np.linalg.pinv(scale * basis).T * window[None, :]).astype(np.float32)
    nfft_pad = ((n_fft + 7) // 8) * 8                                           # 62 -> 64
    fb_pad = np.zeros((nfft_pad, 2 * cutoff), np.float32)
    fb_pad[:n_fft, :] = forward_basis.T
    return (jnp.asarray(fb_pad), jnp.asarray(inverse_basis),
            window.astype(np.float32), nfft_pad, cutoff)


# ------------------------------------------------------------ full forward ---

def encoder_forward(params, x, w, stft_consts, n_fft, hop, nheads):
    fb_pad, inv_basis, window_np, nfft_pad, cutoff = stft_consts
    B, _, L = x.shape
    num_samples = L
    E = cutoff

    # --- STFT framing (reflect pad + strided gather: JAX glue) ---
    pad = n_fft // 2
    xp = jnp.pad(x, ((0, 0), (0, 0), (pad, pad)), mode="reflect")[:, 0, :]
    T = (L + 2 * pad - n_fft) // hop + 1
    fidx = np.arange(T)[:, None] * hop + np.arange(n_fft)[None, :]
    frames = xp[:, fidx]                                             # (B, T, n_fft)
    frames = jnp.pad(frames, ((0, 0), (0, 0), (0, nfft_pad - n_fft)))
    frames2d = frames.reshape(B * T, nfft_pad)

    # --- fused: forward DFT basis -> magnitude -> wav_linear_in (LeakyReLU) ---
    ft, emb = pallas_stft_embed(frames2d, fb_pad, params["wav_in"], cutoff)
    phase = jnp.arctan2(ft[:, cutoff:], ft[:, :cutoff])              # (B*T, c) JAX glue
    cosph, sinph = jnp.cos(phase), jnp.sin(phase)
    p_x = emb.reshape(B, T, E)

    # --- transformer encoder ---
    enc = p_x
    for lp in params["enc_layers"]:
        a = pallas_mha_addln(enc, enc, lp["attn"], lp["ln1"], nheads, fuse_qkv=True)
        enc = pallas_ffn_addln(a.reshape(B * T, E), lp["ffn"], lp["ln2"]).reshape(B, T, E)

    # --- fused: mean over time + msg_linear_in + broadcast adds ---
    tgt = pallas_msg_fuse(enc, p_x, w, params["msg_in"])             # (B, T, E)

    # --- transformer decoder ---
    dec = tgt
    for lp in params["dec_layers"]:
        a = pallas_mha_addln(dec, dec, lp["self_attn"], lp["ln1"], nheads, fuse_qkv=True)
        c = pallas_mha_addln(a, enc, lp["cross_attn"], lp["ln2"], nheads, fuse_qkv=False)
        dec = pallas_ffn_addln(c.reshape(B * T, E), lp["ffn"], lp["ln3"]).reshape(B, T, E)

    # --- fused: wav_linear_out -> (spec*cos, spec*sin) -> inverse DFT basis ---
    frames_out = pallas_wavout_istft(dec.reshape(B * T, E), params["wav_out"],
                                     cosph, sinph, inv_basis)        # (B*T, n_fft)
    frames_out = frames_out.reshape(B, T, n_fft)

    # --- overlap-add + window-sum-square correction (JAX/numpy glue) ---
    out_len = n_fft + hop * (T - 1)
    oidx = (np.arange(T)[:, None] * hop + np.arange(n_fft)[None, :]).reshape(-1)
    ola = jnp.zeros((B, out_len), jnp.float32).at[:, oidx].add(frames_out.reshape(B, -1))
    win_sq = window_np.astype(np.float64) ** 2
    wsum = np.zeros(out_len, dtype=np.float64)
    for t in range(T):
        wsum[t * hop: t * hop + n_fft] += win_sq
    wsum = wsum.astype(np.float32)
    tiny = np.finfo(np.float32).tiny
    wsum_j = jnp.asarray(wsum)
    ola = jnp.where(wsum_j > tiny, ola / jnp.maximum(wsum_j, tiny), ola)
    ola = ola * (float(n_fft) / hop)
    ola = ola[:, pad:]
    ola = ola[:, :num_samples]
    return ola[:, None, :]                                           # (B, 1, num_samples)


# ---------------------------------------------------------------------- main -

if __name__ == "__main__":
    # small-but-consistent config: n_fft=62 -> win_dim = embedding_dim = 32, 8 heads
    n_fft, hop = 62, 16
    msg_length = 8
    nlayers_encoder = 2
    attention_heads = 8
    dim_feedforward = 2048        # PyTorch TransformerEncoder/DecoderLayer default
    B, num_samples = 2, 128

    key = jax.random.PRNGKey(0)
    k_params, k_x, k_w = jax.random.split(key, 3)
    params = init_encoder_params(k_params, n_fft, msg_length, nlayers_encoder, dim_feedforward)

    x = jax.random.normal(k_x, (B, 1, num_samples), jnp.float32)      # audio (B, 1, L)
    w = jax.random.normal(k_w, (B, 1, msg_length), jnp.float32)       # watermark message

    stft_consts = make_stft_consts(n_fft, hop)

    out = encoder_forward(params, x, w, stft_consts, n_fft, hop, attention_heads)
    jax.block_until_ready(out)
    assert out.shape == (B, 1, num_samples), out.shape
    assert bool(jnp.all(jnp.isfinite(out)))
    print("KERNEL_OK")
</pallas_src>

<mosaic_0001>
module attributes {stable_mosaic.version = 11 : i64} {
  func.func @_stft_embed_kernel(%arg0: i32, %arg1: memref<24x64xf32, #tpu.memory_space<vmem>>, %arg2: memref<64x64xf32, #tpu.memory_space<vmem>>, %arg3: memref<32x32xbf16, #tpu.memory_space<vmem>>, %arg4: memref<1x32xf32, #tpu.memory_space<vmem>>, %arg5: memref<24x64xf32, #tpu.memory_space<vmem>>, %arg6: memref<24x32xf32, #tpu.memory_space<vmem>>) attributes {dimension_semantics = [#tpu.dimension_semantics<parallel>], iteration_bounds = array<i64: 1>, scalar_prefetch = 0 : i64, scratch_operands = 0 : i64, tpu.core_type = #tpu.core_type<tc>, window_params = [{transform_indices = @transform_0, window_bounds = array<i64: 24, 64>}, {pipeline_mode = #tpu.pipeline_mode<synchronous>, transform_indices = @transform_1, window_bounds = array<i64: 64, 64>}, {pipeline_mode = #tpu.pipeline_mode<synchronous>, transform_indices = @transform_2, window_bounds = array<i64: 32, 32>}, {pipeline_mode = #tpu.pipeline_mode<synchronous>, transform_indices = @transform_3, window_bounds = array<i64: 1, 32>}, {transform_indices = @transform_4, window_bounds = array<i64: 24, 64>}, {transform_indices = @transform_5, window_bounds = array<i64: 24, 32>}]} {
    %c0 = arith.constant 0 : index
    %c0_0 = arith.constant 0 : index
    %0 = vector.load %arg1[%c0, %c0_0] : memref<24x64xf32, #tpu.memory_space<vmem>>, vector<24x64xf32>
    %c0_1 = arith.constant 0 : index
    %c0_2 = arith.constant 0 : index
    %1 = vector.load %arg2[%c0_1, %c0_2] : memref<64x64xf32, #tpu.memory_space<vmem>>, vector<64x64xf32>
    %cst = arith.constant dense<0.000000e+00> : vector<24x64xf32>
    %2 = tpu.matmul %0, %1, %cst {dimension_numbers = #tpu.dot_dimension_numbers<[1], [0], [0], [1], [0, 0, 1, 1], [], []>} : vector<24x64xf32>, vector<64x64xf32>, vector<24x64xf32> -> vector<24x64xf32>
    %c0_3 = arith.constant 0 : index
    %c0_4 = arith.constant 0 : index
    %3 = vector.load %arg5[%c0_3, %c0_4] : memref<24x64xf32, #tpu.memory_space<vmem>>, vector<24x64xf32>
    tpu.vector_store %arg5[%c0_3, %c0_4], %2 {strides = array<i32>} : memref<24x64xf32, #tpu.memory_space<vmem>>, vector<24x64xf32>,
    %4 = vector.extract_strided_slice %2 {offsets = [0, 0], sizes = [24, 32], strides = [1, 1]} : vector<24x64xf32> to vector<24x32xf32>
    %5 = vector.extract_strided_slice %2 {offsets = [0, 32], sizes = [24, 32], strides = [1, 1]} : vector<24x64xf32> to vector<24x32xf32>
    %6 = arith.mulf %4, %4 : vector<24x32xf32>
    %7 = arith.mulf %5, %5 : vector<24x32xf32>
    %8 = arith.addf %6, %7 : vector<24x32xf32>
    %9 = math.sqrt %8 : vector<24x32xf32>
    %10 = arith.truncf %9 : vector<24x32xf32> to vector<24x32xbf16>
    %c0_5 = arith.constant 0 : index
    %c0_6 = arith.constant 0 : index
    %11 = vector.load %arg3[%c0_5, %c0_6] : memref<32x32xbf16, #tpu.memory_space<vmem>>, vector<32x32xbf16>
    %cst_7 = arith.constant dense<0.000000e+00> : vector<24x32xf32>
    %12 = tpu.matmul %10, %11, %cst_7 {dimension_numbers = #tpu.dot_dimension_numbers<[1], [0], [0], [1], [0, 0, 1, 1], [], []>} : vector<24x32xbf16>, vector<32x32xbf16>, vector<24x32xf32> -> vector<24x32xf32>
    %c0_8 = arith.constant 0 : index
    %c0_9 = arith.constant 0 : index
    %13 = vector.load %arg4[%c0_8, %c0_9] : memref<1x32xf32, #tpu.memory_space<vmem>>, vector<1x32xf32>
    %14 = vector.broadcast %13 : vector<1x32xf32> to vector<24x32xf32>
    %15 = arith.addf %12, %14 : vector<24x32xf32>
    %cst_10 = arith.constant 0.000000e+00 : f32
    %16 = vector.broadcast %cst_10 : f32 to vector<24x32xf32>
    %17 = arith.cmpf ogt, %15, %16 : vector<24x32xf32>
    %cst_11 = arith.constant 0.00999999977 : f32
    %18 = vector.broadcast %cst_11 : f32 to vector<24x32xf32>
    %19 = arith.mulf %18, %15 : vector<24x32xf32>
    %20 = arith.select %17, %15, %19 : vector<24x32xi1>, vector<24x32xf32>
    %c0_12 = arith.constant 0 : index
    %c0_13 = arith.constant 0 : index
    %21 = vector.load %arg6[%c0_12, %c0_13] : memref<24x32xf32, #tpu.memory_space<vmem>>, vector<24x32xf32>
    tpu.vector_store %arg6[%c0_12, %c0_13], %20 {strides = array<i32>} : memref<24x32xf32, #tpu.memory_space<vmem>>, vector<24x32xf32>,
    return
  }
  func.func @transform_0(%arg0: i32) -> (i32, i32) {
    %c0_i32 = arith.constant 0 : i32
    %c0_i32_0 = arith.constant 0 : i32
    return %arg0, %c0_i32 : i32, i32
  }
  func.func @transform_1(%arg0: i32) -> (i32, i32) {
    %c0_i32 = arith.constant 0 : i32
    %c0_i32_0 = arith.constant 0 : i32
    %c0_i32_1 = arith.constant 0 : i32
    return %c0_i32, %c0_i32_0 : i32, i32
  }
  func.func @transform_2(%arg0: i32) -> (i32, i32) {
    %c0_i32 = arith.constant 0 : i32
    %c0_i32_0 = arith.constant 0 : i32
    %c0_i32_1 = arith.constant 0 : i32
    return %c0_i32, %c0_i32_0 : i32, i32
  }
  func.func @transform_3(%arg0: i32) -> (i32, i32) {
    %c0_i32 = arith.constant 0 : i32
    %c0_i32_0 = arith.constant 0 : i32
    %c0_i32_1 = arith.constant 0 : i32
    return %c0_i32, %c0_i32_0 : i32, i32
  }
  func.func @transform_4(%arg0: i32) -> (i32, i32) {
    %c0_i32 = arith.constant 0 : i32
    %c0_i32_0 = arith.constant 0 : i32
    return %arg0, %c0_i32 : i32, i32
  }
  func.func @transform_5(%arg0: i32) -> (i32, i32) {
    %c0_i32 = arith.constant 0 : i32
    %c0_i32_0 = arith.constant 0 : i32
    return %arg0, %c0_i32 : i32, i32
  }
}

</mosaic_0001>

<llo_original>
// kernel: tpu_custom_call.1
$region0: #{tpu_custom_call.1}
  #allocation0 [shape = 'u32[]', space=smem, size = 0x4, offset = 0x4, fixed_abs, tag = 'smem constant byte address 0x4 - core index']
  #allocation1 [shape = 'u32[144,128]{1,0:T(1,128)}', space=vmem, size = 0x12000, scoped, tag = 'internal scratch']
  %s0 = inlined_call_operand.hbm [shape: f32[24,64], index: 0, kind: input, shape index: {}]
  %s1 = inlined_call_operand.hbm [shape: f32[64,64], index: 1, kind: input, shape index: {}]
  %s2 = inlined_call_operand.hbm [shape: bf16[32,32], index: 2, kind: input, shape index: {}]
  %s3 = inlined_call_operand.vmem [shape: f32[1,32], index: 3, kind: input, shape index: {}]
  %s4 = inlined_call_operand.hbm [shape: f32[24,64], index: 4, kind: output, shape index: {0}]
  %s5 = inlined_call_operand.hbm [shape: f32[24,32], index: 5, kind: output, shape index: {1}]
  %6 = xla_tuple %s4, %s5
  %s7 = sld [smem:[#allocation0]]
  $region46: #{tpu_custom_call.1} parent=0
    _
  %s9 = ssub.s32 1, %s7
  %s10 = scalar_select 0, %s9, %s7
  $region1: #{tpu_custom_call.1} parent=0
    #allocation2 [shape = 'u8[12288]{0}', space=vmem, size = 0x3000, scoped, tag = 'input window, operand 0, single buffered']
    #allocation3 [shape = 's32[1]{0}', space=sflag, size = 0x4, scoped, tag = 'scoped memory for tpu_custom_call.1']
    #allocation4 [shape = 's32[1]{0}', space=sflag, size = 0x4, scoped, tag = 'scoped memory for tpu_custom_call.1']
    #allocation5 [shape = 'u8[32768]{0}', space=vmem, size = 0x8000, scoped, tag = 'input window, operand 1, single buffered']
    #allocation6 [shape = 's32[1]{0}', space=sflag, size = 0x4, scoped, tag = 'scoped memory for tpu_custom_call.1']
    #allocation7 [shape = 'u8[8192]{0}', space=vmem, size = 0x2000, scoped, tag = 'input window, operand 2, single buffered']
    #allocation8 [shape = 'u8[12288]{0}', space=vmem, size = 0x3000, scoped, tag = 'output window, operand 0, single buffered']
    #allocation9 [shape = 'u8[12288]{0}', space=vmem, size = 0x3000, scoped, tag = 'output window, operand 1, single buffered']
    #allocation10 [shape = 's32[1]{0}', space=sflag, size = 0x4, scoped, tag = 'scoped memory for tpu_custom_call.1']
    %11 = vsyncpa [#allocation3], 0
    %12 = vsyncpa [#allocation6], 0
    %13 = vsyncpa [#allocation4], 0
    %14 = vsyncpa [#allocation10], 0
    // Predicated region
    $region2: #{tpu_custom_call.1} parent=1 // pred_check
      _
    $region3: #{tpu_custom_call.1} parent=1 // pred_check_branch
      %16 = sbr.rel (0) target = $region5
    $region4: #{tpu_custom_call.1} parent=1 // pred_region
      %s18 = ssub.s32 384, 384
      %19 = vsyncadd [#allocation3], %s18
      %s20 = sshll.u32 [#allocation2], 4
      %s21 = int_to_ptr.vmem [resolvable:$true] %s20
      %26 = dma.hbm_to_vmem [thread:$0]  %s0, 384, %s21, [#allocation3], 128, 128, 8
    $region5: #{tpu_custom_call.1} parent=1 // pred_fallthru
      _
    // Predicated region
    $region6: #{tpu_custom_call.1} parent=1 // pred_check
      _
    $region7: #{tpu_custom_call.1} parent=1 // pred_check_branch
      %28 = sbr.rel (0) target = $region9
    $region8: #{tpu_custom_call.1} parent=1 // pred_region
      %s30 = ssub.s32 1024, 1024
      %31 = vsyncadd [#allocation6], %s30
      %s32 = sshll.u32 [#allocation5], 4
      %s33 = int_to_ptr.vmem [resolvable:$true] %s32
      %38 = dma.hbm_to_vmem [thread:$0]  %s1, 1024, %s33, [#allocation6], 128, 128, 8
    $region9: #{tpu_custom_call.1} parent=1 // pred_fallthru
      _
    // Predicated region
    $region10: #{tpu_custom_call.1} parent=1 // pred_check
      _
    $region11: #{tpu_custom_call.1} parent=1 // pred_check_branch
      %40 = sbr.rel (0) target = $region13
    $region12: #{tpu_custom_call.1} parent=1 // pred_region
      %s42 = ssub.s32 256, 256
      %43 = vsyncadd [#allocation6], %s42
      %s44 = sshll.u32 [#allocation7], 4
      %s45 = int_to_ptr.vmem [resolvable:$true] %s44
      %50 = dma.hbm_to_vmem [thread:$0]  %s2, 256, %s45, [#allocation6], 64, 64, 4
    $region13: #{tpu_custom_call.1} parent=1 // pred_fallthru
      _
    // Predicated region
    $region14: #{tpu_custom_call.1} parent=1 // pred_check
      _
    $region15: #{tpu_custom_call.1} parent=1 // pred_check_branch
      %52 = sbr.rel (0) target = $region17
    $region16: #{tpu_custom_call.1} parent=1 // pred_region
      _
    $region17: #{tpu_custom_call.1} parent=1 // pred_fallthru
      _
    // Predicated region
    $region18: #{tpu_custom_call.1} parent=1 // pred_check
      _
    $region19: #{tpu_custom_call.1} parent=1 // pred_check_branch
      %54 = sbr.rel (0) target = $region21
    $region20: #{tpu_custom_call.1} parent=1 // pred_region
      %55 = dma.done [#allocation3], 384
    $region21: #{tpu_custom_call.1} parent=1 // pred_fallthru
      _
    // Predicated region
    $region22: #{tpu_custom_call.1} parent=1 // pred_check
      _
    $region23: #{tpu_custom_call.1} parent=1 // pred_check_branch
      %57 = sbr.rel (0) target = $region25
    $region24: #{tpu_custom_call.1} parent=1 // pred_region
      %58 = dma.done [#allocation6], 1024
    $region25: #{tpu_custom_call.1} parent=1 // pred_fallthru
      _
    // Predicated region
    $region26: #{tpu_custom_call.1} parent=1 // pred_check
      _
    $region27: #{tpu_custom_call.1} parent=1 // pred_check_branch
      %60 = sbr.rel (0) target = $region29
    $region28: #{tpu_custom_call.1} parent=1 // pred_region
      %61 = dma.done [#allocation6], 256
    $region29: #{tpu_custom_call.1} parent=1 // pred_fallthru
      _
    %v63 = vld [vmem:[#allocation2] sm:$0xff]
    %v64 = vld [vmem:[#allocation2 + $0x8] sm:$0xff]
    %v65 = vld [vmem:[#allocation2 + $0x10] sm:$0xff]
    %v66 = vld [vmem:[#allocation5] sm:$0xff]
    %v67 = vld [vmem:[#allocation5 + $0x8] sm:$0xff]
    %v68 = vld [vmem:[#allocation5 + $0x10] sm:$0xff]
    %v69 = vld [vmem:[#allocation5 + $0x18] sm:$0xff]
    %v70 = vld [vmem:[#allocation5 + $0x20] sm:$0xff]
    %v71 = vld [vmem:[#allocation5 + $0x28] sm:$0xff]
    %v72 = vld [vmem:[#allocation5 + $0x30] sm:$0xff]
    %v73 = vld [vmem:[#allocation5 + $0x38] sm:$0xff]
    %vm74 = vcmask 523264
    %v76 = vsel %vm74, %v63, 0
    %v79 = vsel %vm74, %v64, 0
    %v82 = vsel %vm74, %v65, 0
    %84 = vmatprep.subr.mxu0 0.0
    %85 = vmatpush1.msra.mxu0 0.0
    %86 = vmatprep.subr.mxu0 0.0
    %87 = vmatpush1.msra.mxu0 0.0
    %88 = vmatprep.subr.mxu0 0.0
    %89 = vmatpush1.msra.mxu0 0.0
    %90 = vmatprep.subr.mxu0 0.0
    %91 = vmatpush1.msra.mxu0 0.0
    %92 = vmatprep.subr.mxu0 0.0
    %93 = vmatpush1.msra.mxu0 0.0
    %94 = vmatprep.subr.mxu0 0.0
    %95 = vmatpush1.msra.mxu0 0.0
    %96 = vmatprep.subr.mxu0 0.0
    %97 = vmatpush1.msra.mxu0 0.0
    %98 = vmatprep.subr.mxu0 0.0
    %99 = vmatpush1.msra.mxu0 0.0
    %100 = vmatprep.subr.mxu0 0.0
    %101 = vmatpush1.msra.mxu0 %v73
    %102 = vmatprep.subr.mxu0 0.0
    %103 = vmatpush1.msra.mxu0 %v72
    %104 = vmatprep.subr.mxu0 0.0
    %105 = vmatpush1.msra.mxu0 %v71
    %106 = vmatprep.subr.mxu0 0.0
    %107 = vmatpush1.msra.mxu0 %v70
    %108 = vmatprep.subr.mxu0 0.0
    %109 = vmatpush1.msra.mxu0 %v69
    %110 = vmatprep.subr.mxu0 0.0
    %111 = vmatpush1.msra.mxu0 %v68
    %112 = vmatprep.subr.mxu0 0.0
    %113 = vmatpush1.msra.mxu0 %v67
    %114 = vmatprep.subr.mxu0 0.0
    %115 = vmatpush1.msra.mxu0 %v66
    %116 = vmatprep.subr.mxu0 0.0
    %117 = vmatpush2.msra.mxu0 0.0
    %118 = vmatprep.subr.mxu0 0.0
    %119 = vmatpush2.msra.mxu0 0.0
    %120 = vmatprep.subr.mxu0 0.0
    %121 = vmatpush2.msra.mxu0 0.0
    %122 = vmatprep.subr.mxu0 0.0
    %123 = vmatpush2.msra.mxu0 0.0
    %124 = vmatprep.subr.mxu0 0.0
    %125 = vmatpush2.msra.mxu0 0.0
    %126 = vmatprep.subr.mxu0 0.0
    %127 = vmatpush2.msra.mxu0 0.0
    %128 = vmatprep.subr.mxu0 0.0
    %129 = vmatpush2.msra.mxu0 0.0
    %130 = vmatprep.subr.mxu0 0.0
    %131 = vmatpush2.msra.mxu0 0.0
    %132 = vmatprep.subr.mxu0 0.0
    %133 = vmatpush2.msra.mxu0 0.0
    %134 = vmatprep.subr.mxu0 0.0
    %135 = vmatpush2.msra.mxu0 0.0
    %136 = vmatprep.subr.mxu0 0.0
    %137 = vmatpush2.msra.mxu0 0.0
    %138 = vmatprep.subr.mxu0 0.0
    %139 = vmatpush2.msra.mxu0 0.0
    %140 = vmatprep.subr.mxu0 0.0
    %141 = vmatpush2.msra.mxu0 0.0
    %142 = vmatprep.subr.mxu0 0.0
    %143 = vmatpush2.msra.mxu0 0.0
    %144 = vmatprep.subr.mxu0 0.0
    %145 = vmatpush2.msra.mxu0 0.0
    %146 = vmatprep.subr.mxu0 0.0
    %147 = vmatpush2.msra.mxu0 0.0
    %148 = vmatprep.mubr.f32.mxu0 0.0
    %149 = vmatmul.mubr.f32.gmra.mxu0 %v76
    %v150 = vpop.f32.mrf.mxu0
    %v151 = vadd.f32 0.0, %v150
    %v152 = vpop.f32.mrf.mxu0
    %153 = vmatprep.mubr.f32.mxu0 0.0
    %154 = vmatmul.mubr.f32.gmra.mxu0 %v79
    %v155 = vpop.f32.mrf.mxu0
    %v156 = vadd.f32 0.0, %v155
    %v157 = vpop.f32.mrf.mxu0
    %158 = vmatprep.mubr.f32.mxu0 0.0
    %159 = vmatmul.mubr.f32.gmra.mxu0 %v82
    %v160 = vpop.f32.mrf.mxu0
    %v161 = vadd.f32 0.0, %v160
    %v162 = vpop.f32.mrf.mxu0
    %163 = vdwg.mxu0
    %164 = vst.msk [vmem:[#allocation8] sm:$0xff] %vm74, %v151
    %165 = vst.msk [vmem:[#allocation8 + $0x8] sm:$0xff] %vm74, %v156
    %166 = vst.msk [vmem:[#allocation8 + $0x10] sm:$0xff] %vm74, %v161
    %v167 = vmul.f32 %v151, %v151
    %v168 = vmul.f32 %v156, %v156
    %v169 = vmul.f32 %v161, %v161
    %173 = vrot.lane.b32.xlu0 %v167, 96
    %v174 = vpop.permute.xlu0 %173
    %175 = vrot.lane.b32.xlu0 %v168, 96
    %v176 = vpop.permute.xlu0 %175
    %177 = vrot.lane.b32.xlu0 %v169, 96
    %v178 = vpop.permute.xlu0 %177
    %v182 = vadd.f32 %v167, %v174
    %v183 = vadd.f32 %v168, %v176
    %v184 = vadd.f32 %v169, %v178
    %v185 = vrsqrt.pop %v182
    %v186 = vmul.f32 %v182, %v185
    %vm187 = vcmp.eq.f32.partialorder %v182, inf
    %v188 = vsel %vm187, %v182, %v186
    %vm189 = vcmp.eq.f32.partialorder %v182, 0.0
    %v190 = vand.u32 %v182, 2147483648
    %v191 = vsel %vm189, %v190, %v188
    %v192 = vrsqrt.pop %v183
    %v193 = vmul.f32 %v183, %v192
    %vm194 = vcmp.eq.f32.partialorder %v183, inf
    %v195 = vsel %vm194, %v183, %v193
    %vm196 = vcmp.eq.f32.partialorder %v183, 0.0
    %v197 = vand.u32 %v183, 2147483648
    %v198 = vsel %vm196, %v197, %v195
    %v199 = vrsqrt.pop %v184
    %v200 = vmul.f32 %v184, %v199
    %vm201 = vcmp.eq.f32.partialorder %v184, inf
    %v202 = vsel %vm201, %v184, %v200
    %vm203 = vcmp.eq.f32.partialorder %v184, 0.0
    %v204 = vand.u32 %v184, 2147483648
    %v205 = vsel %vm203, %v204, %v202
    %v206 = vpack.c.bf16 %v198, %v191
    %v207 = vpack.c.bf16 %v205, %v205
    %v208 = vld [vmem:[#allocation7] sm:$0xf]
    %v209 = vld [vmem:[#allocation7 + $0x4] sm:$0xf]
    %v210 = vld [vmem:[#allocation7 + $0x8] sm:$0xf]
    %v211 = vld [vmem:[#allocation7 + $0xc] sm:$0xf]
    %v212 = vld [vmem:[%s3] sm:$0x1]
    %v214 = vlaneseq
    %v215 = vshrl.u32 %v214, 7
    %v216 = vsub.s32 0, %v215
    %v217 = vrot.slane %v212, %v216
    %v223 = vunpack.c.l.b16 %v208
    %v224 = vunpack.c.l.b16 %v209
    %v225 = vunpack.c.l.b16 %v210
    %v226 = vunpack.c.l.b16 %v211
    %v227 = vpack.c.b16 %v224, %v223
    %v228 = vpack.c.b16 %v226, %v225
    %vm231 = vcmask 261120
    %v233 = vsel %vm231, %v206, 0
    %v236 = vsel %vm231, %v207, 0
    %238 = vmatprep.subr.bf16.mxu0 0
    %239 = vmatpush1.bf16.msra.mxu0 0
    %240 = vmatprep.subr.bf16.mxu0 0
    %241 = vmatpush1.bf16.msra.mxu0 0
    %242 = vmatprep.subr.bf16.mxu0 0
    %243 = vmatpush1.bf16.msra.mxu0 0
    %244 = vmatprep.subr.bf16.mxu0 0
    %245 = vmatpush1.bf16.msra.mxu0 0
    %246 = vmatprep.subr.bf16.mxu0 0
    %247 = vmatpush1.bf16.msra.mxu0 0
    %248 = vmatprep.subr.bf16.mxu0 0
    %249 = vmatpush1.bf16.msra.mxu0 0
    %250 = vmatprep.subr.bf16.mxu0 0
    %251 = vmatpush1.bf16.msra.mxu0 %v228
    %252 = vmatprep.subr.bf16.mxu0 0
    %253 = vmatpush1.bf16.msra.mxu0 %v227
    %254 = vmatprep.subr.bf16.mxu0 0
    %255 = vmatpush2.bf16.msra.mxu0 0
    %256 = vmatprep.subr.bf16.mxu0 0
    %257 = vmatpush2.bf16.msra.mxu0 0
    %258 = vmatprep.subr.bf16.mxu0 0
    %259 = vmatpush2.bf16.msra.mxu0 0
    %260 = vmatprep.subr.bf16.mxu0 0
    %261 = vmatpush2.bf16.msra.mxu0 0
    %262 = vmatprep.subr.bf16.mxu0 0
    %263 = vmatpush2.bf16.msra.mxu0 0
    %264 = vmatprep.subr.bf16.mxu0 0
    %265 = vmatpush2.bf16.msra.mxu0 0
    %266 = vmatprep.subr.bf16.mxu0 0
    %267 = vmatpush2.bf16.msra.mxu0 0
    %268 = vmatprep.subr.bf16.mxu0 0
    %269 = vmatpush2.bf16.msra.mxu0 0
    %270 = vmatprep.mubr.bf16.mxu0 0
    %271 = vmatmul.mubr.bf16.gmra.mxu0 %v233
    %v272 = vpop.f32.mrf.mxu0
    %v273 = vadd.f32 %v217, %v272
    %v274 = vpop.f32.mrf.mxu0
    %v275 = vpop.f32.mrf.mxu0
    %v276 = vadd.f32 %v217, %v275
    %v277 = vpop.f32.mrf.mxu0
    %278 = vmatprep.mubr.bf16.mxu0 0
    %279 = vmatmul.mubr.bf16.gmra.mxu0 %v236
    %v280 = vpop.f32.mrf.mxu0
    %v281 = vadd.f32 %v217, %v280
    %v282 = vpop.f32.mrf.mxu0
    %v283 = vpop.f32.mrf.mxu0
    %v284 = vpop.f32.mrf.mxu0
    %285 = vdwg.mxu0
    %vm286 = vcmp.gt.f32.partialorder %v273, 0.0
    %vm287 = vcmp.gt.f32.partialorder %v276, 0.0
    %vm288 = vcmp.gt.f32.partialorder %v281, 0.0
    %v289 = vmul.f32 %v273, 0.01
    %v290 = vmul.f32 %v276, 0.01
    %v291 = vmul.f32 %v281, 0.01
    %v292 = vsel %vm286, %v273, %v289
    %v293 = vsel %vm287, %v276, %v290
    %v294 = vsel %vm288, %v281, %v291
    %295 = vst.msk [vmem:[#allocation9] sm:$0xff] %vm231, %v292
    %296 = vst.msk [vmem:[#allocation9 + $0x8] sm:$0xff] %vm231, %v293
    %297 = vst.msk [vmem:[#allocation9 + $0x10] sm:$0xff] %vm231, %v294
    // Predicated region
    $region30: #{tpu_custom_call.1} parent=1 // pred_check
      _
    $region31: #{tpu_custom_call.1} parent=1 // pred_check_branch
      %299 = sbr.rel (0) target = $region33
    $region32: #{tpu_custom_call.1} parent=1 // pred_region
      %s301 = ssub.s32 384, 384
      %302 = vsyncadd [#allocation4], %s301
      %s303 = sshll.u32 [#allocation8], 4
      %s304 = int_to_ptr.vmem [resolvable:$true] %s303
      %309 = dma.vmem_to_hbm [thread:$0]  %s304, 384, %s4, [#allocation4], 128, 128, 8
    $region33: #{tpu_custom_call.1} parent=1 // pred_fallthru
      _
    // Predicated region
    $region34: #{tpu_custom_call.1} parent=1 // pred_check
      _
    $region35: #{tpu_custom_call.1} parent=1 // pred_check_branch
      %311 = sbr.rel (0) target = $region37
    $region36: #{tpu_custom_call.1} parent=1 // pred_region
      %s313 = ssub.s32 384, 384
      %314 = vsyncadd [#allocation10], %s313
      %s315 = sshll.u32 [#allocation9], 4
      %s316 = int_to_ptr.vmem [resolvable:$true] %s315
      %321 = dma.vmem_to_hbm [thread:$0]  %s316, 384, %s5, [#allocation10], 128, 128, 8
    $region37: #{tpu_custom_call.1} parent=1 // pred_fallthru
      _
    // Predicated region
    $region38: #{tpu_custom_call.1} parent=1 // pred_check
      _
    $region39: #{tpu_custom_call.1} parent=1 // pred_check_branch
      %323 = sbr.rel (0) target = $region41
    $region40: #{tpu_custom_call.1} parent=1 // pred_region
      %324 = dma.done [#allocation4], 384
    $region41: #{tpu_custom_call.1} parent=1 // pred_fallthru
      _
    // Predicated region
    $region42: #{tpu_custom_call.1} parent=1 // pred_check
      _
    $region43: #{tpu_custom_call.1} parent=1 // pred_check_branch
      %326 = sbr.rel (0) target = $region45
    $region44: #{tpu_custom_call.1} parent=1 // pred_region
      %327 = dma.done [#allocation10], 384
    $region45: #{tpu_custom_call.1} parent=1 // pred_fallthru
      _
    %328 = vsyncpa [#allocation3], 1
    %329 = vsyncpa [#allocation6], 1
    %330 = vsyncpa [#allocation4], 1
    %331 = vsyncpa [#allocation10], 1

</llo_original>
